<compile_context>
chip_gen: v5e
topology: v5e:2x2
jax: 0.10.0
libtpu: 0.0.40
codegen_flags: <defaults>
</compile_context>

<pallas_src>
import jax
import jax.numpy as jnp
from jax import lax
from jax.experimental import pallas as pl
from jax.experimental.pallas import tpu as pltpu


_LANE = 128
# Contract the last dims of both operands: (8,H) . (TB,H)^T -> (8,TB).
_NT_DIM_NUMBERS = (((1,), (1,)), ((), ()))


def _round_up(n, m):
    return ((n + m - 1) // m) * m


def _qnet_kernel(x_ref, a_ref, ws_ref, wa_ref, bcat_ref, wq_ref, bq_ref,
                 wt_ref, bt_ref, o_ref):
    f32 = jnp.float32
    bf16 = jnp.bfloat16

    # Fused fc_s / fc_a / torch.cat:
    #   h_cat = relu(x @ [Ws|0] + a @ [0|Wa] + [bs|ba])          (TB, 128)
    h = jnp.dot(x_ref[...].astype(bf16), ws_ref[...], preferred_element_type=f32)
    h = h + jnp.dot(a_ref[...].astype(bf16), wa_ref[...], preferred_element_type=f32)
    h = jnp.maximum(h + bcat_ref[...], 0.0)

    # fc_q + relu                                                (TB, 64)
    q = jnp.dot(h.astype(bf16), wq_ref[...], preferred_element_type=f32)
    q = jnp.maximum(q + bq_ref[...], 0.0)

    # Fused fc_out ∘ fc_out2 (tail), lane-dense output:
    #   (8,64) . (TB,64)^T -> (8,TB); every lhs row is the same W_tail^T copy,
    #   so row 0 holds the Q value for all TB batch rows, laid out along lanes.
    t = lax.dot_general(wt_ref[...], q, _NT_DIM_NUMBERS,
                        preferred_element_type=f32)
    o_ref[...] = (t[0:1, :] + bt_ref[...]).astype(o_ref.dtype)


def qnet_forward(x, a, params, *, block_rows=2048):
    """x: (B, 24), a: (B, 4)  (f32 or bf16).  Returns q: (B, 1) float32."""
    f32 = jnp.float32
    bf16 = jnp.bfloat16
    x = jnp.asarray(x)
    a = jnp.asarray(a)
    B, S = x.shape
    A = a.shape[1]

    w_s = params["w_s"].astype(f32)     # (S, H)
    w_a = params["w_a"].astype(f32)     # (A, H)
    w_q = params["w_q"].astype(f32)     # (2H, H)
    w_o = params["w_o"].astype(f32)     # (H, 32)
    w_o2 = params["w_o2"].astype(f32)   # (32, 1)
    b_s = params["b_s"].astype(f32)
    b_a = params["b_a"].astype(f32)
    b_q = params["b_q"].astype(f32)
    b_o = params["b_o"].astype(f32)
    b_o2 = params["b_o2"].astype(f32)

    H = w_s.shape[1]
    if w_a.shape[1] != H or w_q.shape[0] != 2 * H:
        raise ValueError("fc_q input width must equal fc_s width + fc_a width")

    # --- Trace-time weight prep (zero-padding + exact algebra) --------------
    ws_pad = jnp.pad(w_s, ((0, 0), (0, H))).astype(bf16)      # (S, 2H) = [Ws|0]
    wa_pad = jnp.pad(w_a, ((0, 0), (H, 0))).astype(bf16)      # (A, 2H) = [0|Wa]
    b_cat = jnp.concatenate([b_s, b_a], axis=1)               # (1, 2H)  f32
    w_q_bf = w_q.astype(bf16)                                 # (2H, H)
    # fc_out ∘ fc_out2 composed in f32 (no activation between -> exact algebra).
    w_tail = w_o @ w_o2                                       # (H, 1)   f32
    b_tail = b_o @ w_o2 + b_o2                                # (1, 1)   f32
    wt_rows = jnp.tile(w_tail.T, (8, 1))                      # (8, H)   f32

    # --- Batch tiling --------------------------------------------------------
    tb = _round_up(max(1, min(block_rows, B)), _LANE)
    Bp = _round_up(B, tb)
    # v7x: if everything landed in one step but the batch is big, split it in
    # two so dimension_semantics=("parallel",) can engage both TensorCores.
    if Bp // tb == 1 and B > 2 * _LANE:
        tb = _round_up(-(-B // 2), _LANE)
        Bp = _round_up(B, tb)
    if Bp != B:
        # Padded rows compute relu(bias) garbage; they are sliced off below and
        # would need masking if an in-kernel batch reduction were ever added.
        x = jnp.pad(x, ((0, Bp - B), (0, 0)))
        a = jnp.pad(a, ((0, Bp - B), (0, 0)))

    grid = (Bp // tb,)

    def row_spec(cols):                 # batch-tiled activations
        return pl.BlockSpec((tb, cols), lambda i: (i, 0))

    def res_spec(arr):                  # VMEM-resident weights / biases
        return pl.BlockSpec(arr.shape, lambda i: (0, 0))

    weights = [ws_pad, wa_pad, w_q_bf, wt_rows]
    biases = [b_cat, b_q, b_tail]
    flops = 2 * Bp * (S * 2 * H + A * 2 * H + 2 * H * H + H)
    bytes_accessed = (
        sum(w.size * w.dtype.itemsize for w in weights)
        + sum(b.size * b.dtype.itemsize for b in biases)
        + Bp * S * x.dtype.itemsize + Bp * A * a.dtype.itemsize
        + Bp * 4)

    # Activation VMEM per step (double-buffered, 128-lane padded rows) + slack.
    est_vmem = 2 * (2 * tb * _LANE * 4 + 8 * tb * 4) + (2 << 20)
    vmem_limit = int(min(max(est_vmem, 32 << 20), 48 << 20))

    out = pl.pallas_call(
        _qnet_kernel,
        out_shape=jax.ShapeDtypeStruct((1, Bp), f32),
        grid=grid,
        in_specs=[
            row_spec(S), row_spec(A),
            res_spec(ws_pad), res_spec(wa_pad), res_spec(b_cat),
            res_spec(w_q_bf), res_spec(b_q),
            res_spec(wt_rows), res_spec(b_tail),
        ],
        out_specs=pl.BlockSpec((1, tb), lambda i: (0, i)),
        compiler_params=pltpu.CompilerParams(
            dimension_semantics=("parallel",),
            vmem_limit_bytes=vmem_limit,
        ),
        cost_estimate=pl.CostEstimate(
            flops=flops, transcendentals=0, bytes_accessed=bytes_accessed),
    )(x, a, ws_pad, wa_pad, b_cat, w_q_bf, b_q, wt_rows, b_tail)

    return out[0, :B].reshape(B, 1)


def init_params(key):
    """nn.Linear-style init (uniform +/- 1/sqrt(fan_in)); f32 weights stored as
    (in_features, out_features), biases as (1, out_features)."""

    def linear(k, fan_in, fan_out):
        kw, kb = jax.random.split(k)
        bound = 1.0 / (fan_in ** 0.5)
        w = jax.random.uniform(kw, (fan_in, fan_out), jnp.float32, -bound, bound)
        b = jax.random.uniform(kb, (1, fan_out), jnp.float32, -bound, bound)
        return w, b

    k1, k2, k3, k4, k5 = jax.random.split(key, 5)
    w_s, b_s = linear(k1, 24, 64)
    w_a, b_a = linear(k2, 4, 64)
    w_q, b_q = linear(k3, 128, 64)
    w_o, b_o = linear(k4, 64, 32)
    w_o2, b_o2 = linear(k5, 32, 1)
    return {
        "w_s": w_s, "b_s": b_s,
        "w_a": w_a, "b_a": b_a,
        "w_q": w_q, "b_q": b_q,
        "w_o": w_o, "b_o": b_o,
        "w_o2": w_o2, "b_o2": b_o2,
    }


def reference_forward(x, a, p):
    """Pure-JAX reference with the ORIGINAL 5-layer structure and the same
    dtype policy as the kernel: bf16 matmul operands + f32 accumulation for the
    three hidden layers, plain f32 for the activation-free tail."""
    f32, bf16 = jnp.float32, jnp.bfloat16

    def lin(h, w, b):
        return jnp.dot(h.astype(bf16), w.astype(bf16),
                       preferred_element_type=f32) + b

    h1 = jnp.maximum(lin(x, p["w_s"], p["b_s"]), 0.0)
    h2 = jnp.maximum(lin(a, p["w_a"], p["b_a"]), 0.0)
    cat = jnp.concatenate([h1, h2], axis=1)
    q = jnp.maximum(lin(cat, p["w_q"], p["b_q"]), 0.0)
    q = q @ p["w_o"] + p["b_o"]          # f32 tail (matches the kernel's f32 tail)
    q = q @ p["w_o2"] + p["b_o2"]
    return q


if __name__ == "__main__":
    key = jax.random.PRNGKey(0)
    kx, ka, kp = jax.random.split(key, 3)

    B = 300  # not a multiple of the 128-row tile -> exercises padding + a 3-step grid
    x = jax.random.normal(kx, (B, 24), jnp.float32)                 # BipedalWalker state
    a = jax.random.uniform(ka, (B, 4), jnp.float32, -1.0, 1.0)      # action
    params = init_params(kp)

    q = qnet_forward(x, a, params, block_rows=128)   # tb=128 -> grid=(3,)
    q = jax.block_until_ready(q)

    ref = reference_forward(x, a, params)
    assert q.shape == (B, 1), q.shape
    max_err = float(jnp.max(jnp.abs(q - ref)))
    assert jnp.allclose(q, ref, atol=2e-3, rtol=2e-3), f"max abs err {max_err}"
    print("KERNEL_OK")
</pallas_src>

<mosaic_0001>
module attributes {stable_mosaic.version = 11 : i64} {
  func.func @_qnet_kernel(%arg0: i32, %arg1: memref<128x24xf32, #tpu.memory_space<vmem>>, %arg2: memref<128x4xf32, #tpu.memory_space<vmem>>, %arg3: memref<24x128xbf16, #tpu.memory_space<vmem>>, %arg4: memref<4x128xbf16, #tpu.memory_space<vmem>>, %arg5: memref<1x128xf32, #tpu.memory_space<vmem>>, %arg6: memref<128x64xbf16, #tpu.memory_space<vmem>>, %arg7: memref<1x64xf32, #tpu.memory_space<vmem>>, %arg8: memref<8x64xf32, #tpu.memory_space<vmem>>, %arg9: memref<1x1xf32, #tpu.memory_space<vmem>>, %arg10: memref<1x128xf32, #tpu.memory_space<vmem>>) attributes {dimension_semantics = [#tpu.dimension_semantics<parallel>], iteration_bounds = array<i64: 3>, scalar_prefetch = 0 : i64, scratch_operands = 0 : i64, tpu.core_type = #tpu.core_type<tc>, window_params = [{transform_indices = @transform_0, window_bounds = array<i64: 128, 24>}, {transform_indices = @transform_1, window_bounds = array<i64: 128, 4>}, {pipeline_mode = #tpu.pipeline_mode<synchronous>, transform_indices = @transform_2, window_bounds = array<i64: 24, 128>}, {pipeline_mode = #tpu.pipeline_mode<synchronous>, transform_indices = @transform_3, window_bounds = array<i64: 4, 128>}, {pipeline_mode = #tpu.pipeline_mode<synchronous>, transform_indices = @transform_4, window_bounds = array<i64: 1, 128>}, {pipeline_mode = #tpu.pipeline_mode<synchronous>, transform_indices = @transform_5, window_bounds = array<i64: 128, 64>}, {pipeline_mode = #tpu.pipeline_mode<synchronous>, transform_indices = @transform_6, window_bounds = array<i64: 1, 64>}, {pipeline_mode = #tpu.pipeline_mode<synchronous>, transform_indices = @transform_7, window_bounds = array<i64: 8, 64>}, {pipeline_mode = #tpu.pipeline_mode<synchronous>, transform_indices = @transform_8, window_bounds = array<i64: 1, 1>}, {transform_indices = @transform_9, window_bounds = array<i64: 1, 128>}]} {
    %c0 = arith.constant 0 : index
    %c0_0 = arith.constant 0 : index
    %0 = vector.load %arg1[%c0, %c0_0] : memref<128x24xf32, #tpu.memory_space<vmem>>, vector<128x24xf32>
    %1 = arith.truncf %0 : vector<128x24xf32> to vector<128x24xbf16>
    %c0_1 = arith.constant 0 : index
    %c0_2 = arith.constant 0 : index
    %2 = vector.load %arg3[%c0_1, %c0_2] : memref<24x128xbf16, #tpu.memory_space<vmem>>, vector<24x128xbf16>
    %cst = arith.constant dense<0.000000e+00> : vector<128x128xf32>
    %3 = tpu.matmul %1, %2, %cst {dimension_numbers = #tpu.dot_dimension_numbers<[1], [0], [0], [1], [0, 0, 1, 1], [], []>} : vector<128x24xbf16>, vector<24x128xbf16>, vector<128x128xf32> -> vector<128x128xf32>
    %c0_3 = arith.constant 0 : index
    %c0_4 = arith.constant 0 : index
    %4 = vector.load %arg2[%c0_3, %c0_4] : memref<128x4xf32, #tpu.memory_space<vmem>>, vector<128x4xf32>
    %5 = arith.truncf %4 : vector<128x4xf32> to vector<128x4xbf16>
    %c0_5 = arith.constant 0 : index
    %c0_6 = arith.constant 0 : index
    %6 = vector.load %arg4[%c0_5, %c0_6] : memref<4x128xbf16, #tpu.memory_space<vmem>>, vector<4x128xbf16>
    %cst_7 = arith.constant dense<0.000000e+00> : vector<128x128xf32>
    %7 = tpu.matmul %5, %6, %cst_7 {dimension_numbers = #tpu.dot_dimension_numbers<[1], [0], [0], [1], [0, 0, 1, 1], [], []>} : vector<128x4xbf16>, vector<4x128xbf16>, vector<128x128xf32> -> vector<128x128xf32>
    %8 = arith.addf %3, %7 : vector<128x128xf32>
    %c0_8 = arith.constant 0 : index
    %c0_9 = arith.constant 0 : index
    %9 = vector.load %arg5[%c0_8, %c0_9] : memref<1x128xf32, #tpu.memory_space<vmem>>, vector<1x128xf32>
    %10 = vector.broadcast %9 : vector<1x128xf32> to vector<128x128xf32>
    %11 = arith.addf %8, %10 : vector<128x128xf32>
    %cst_10 = arith.constant 0.000000e+00 : f32
    %12 = vector.broadcast %cst_10 : f32 to vector<128x128xf32>
    %13 = arith.maximumf %11, %12 : vector<128x128xf32>
    %14 = arith.truncf %13 : vector<128x128xf32> to vector<128x128xbf16>
    %c0_11 = arith.constant 0 : index
    %c0_12 = arith.constant 0 : index
    %15 = vector.load %arg6[%c0_11, %c0_12] : memref<128x64xbf16, #tpu.memory_space<vmem>>, vector<128x64xbf16>
    %cst_13 = arith.constant dense<0.000000e+00> : vector<128x64xf32>
    %16 = tpu.matmul %14, %15, %cst_13 {dimension_numbers = #tpu.dot_dimension_numbers<[1], [0], [0], [1], [0, 0, 1, 1], [], []>} : vector<128x128xbf16>, vector<128x64xbf16>, vector<128x64xf32> -> vector<128x64xf32>
    %c0_14 = arith.constant 0 : index
    %c0_15 = arith.constant 0 : index
    %17 = vector.load %arg7[%c0_14, %c0_15] : memref<1x64xf32, #tpu.memory_space<vmem>>, vector<1x64xf32>
    %18 = vector.broadcast %17 : vector<1x64xf32> to vector<128x64xf32>
    %19 = arith.addf %16, %18 : vector<128x64xf32>
    %cst_16 = arith.constant 0.000000e+00 : f32
    %20 = vector.broadcast %cst_16 : f32 to vector<128x64xf32>
    %21 = arith.maximumf %19, %20 : vector<128x64xf32>
    %c0_17 = arith.constant 0 : index
    %c0_18 = arith.constant 0 : index
    %22 = vector.load %arg8[%c0_17, %c0_18] : memref<8x64xf32, #tpu.memory_space<vmem>>, vector<8x64xf32>
    %cst_19 = arith.constant dense<0.000000e+00> : vector<8x128xf32>
    %23 = tpu.matmul %22, %21, %cst_19 {dimension_numbers = #tpu.dot_dimension_numbers<[1], [1], [0], [0], [0, 0, 1, 0], [], []>} : vector<8x64xf32>, vector<128x64xf32>, vector<8x128xf32> -> vector<8x128xf32>
    %24 = vector.extract_strided_slice %23 {offsets = [0, 0], sizes = [1, 128], strides = [1, 1]} : vector<8x128xf32> to vector<1x128xf32>
    %c0_20 = arith.constant 0 : index
    %c0_21 = arith.constant 0 : index
    %25 = vector.load %arg9[%c0_20, %c0_21] : memref<1x1xf32, #tpu.memory_space<vmem>>, vector<1x1xf32>
    %26 = vector.broadcast %25 : vector<1x1xf32> to vector<1x128xf32>
    %27 = arith.addf %24, %26 : vector<1x128xf32>
    %c0_22 = arith.constant 0 : index
    %c0_23 = arith.constant 0 : index
    %28 = vector.load %arg10[%c0_22, %c0_23] : memref<1x128xf32, #tpu.memory_space<vmem>>, vector<1x128xf32>
    tpu.vector_store %arg10[%c0_22, %c0_23], %27 {strides = array<i32>} : memref<1x128xf32, #tpu.memory_space<vmem>>, vector<1x128xf32>,
    return
  }
  func.func @transform_0(%arg0: i32) -> (i32, i32) {
    %c0_i32 = arith.constant 0 : i32
    %c0_i32_0 = arith.constant 0 : i32
    return %arg0, %c0_i32 : i32, i32
  }
  func.func @transform_1(%arg0: i32) -> (i32, i32) {
    %c0_i32 = arith.constant 0 : i32
    %c0_i32_0 = arith.constant 0 : i32
    return %arg0, %c0_i32 : i32, i32
  }
  func.func @transform_2(%arg0: i32) -> (i32, i32) {
    %c0_i32 = arith.constant 0 : i32
    %c0_i32_0 = arith.constant 0 : i32
    %c0_i32_1 = arith.constant 0 : i32
    return %c0_i32, %c0_i32_0 : i32, i32
  }
  func.func @transform_3(%arg0: i32) -> (i32, i32) {
    %c0_i32 = arith.constant 0 : i32
    %c0_i32_0 = arith.constant 0 : i32
    %c0_i32_1 = arith.constant 0 : i32
    return %c0_i32, %c0_i32_0 : i32, i32
  }
  func.func @transform_4(%arg0: i32) -> (i32, i32) {
    %c0_i32 = arith.constant 0 : i32
    %c0_i32_0 = arith.constant 0 : i32
    %c0_i32_1 = arith.constant 0 : i32
    return %c0_i32, %c0_i32_0 : i32, i32
  }
  func.func @transform_5(%arg0: i32) -> (i32, i32) {
    %c0_i32 = arith.constant 0 : i32
    %c0_i32_0 = arith.constant 0 : i32
    %c0_i32_1 = arith.constant 0 : i32
    return %c0_i32, %c0_i32_0 : i32, i32
  }
  func.func @transform_6(%arg0: i32) -> (i32, i32) {
    %c0_i32 = arith.constant 0 : i32
    %c0_i32_0 = arith.constant 0 : i32
    %c0_i32_1 = arith.constant 0 : i32
    return %c0_i32, %c0_i32_0 : i32, i32
  }
  func.func @transform_7(%arg0: i32) -> (i32, i32) {
    %c0_i32 = arith.constant 0 : i32
    %c0_i32_0 = arith.constant 0 : i32
    %c0_i32_1 = arith.constant 0 : i32
    return %c0_i32, %c0_i32_0 : i32, i32
  }
  func.func @transform_8(%arg0: i32) -> (i32, i32) {
    %c0_i32 = arith.constant 0 : i32
    %c0_i32_0 = arith.constant 0 : i32
    %c0_i32_1 = arith.constant 0 : i32
    return %c0_i32, %c0_i32_0 : i32, i32
  }
  func.func @transform_9(%arg0: i32) -> (i32, i32) {
    %c0_i32 = arith.constant 0 : i32
    %c0_i32_0 = arith.constant 0 : i32
    return %c0_i32, %arg0 : i32, i32
  }
}

</mosaic_0001>

<llo_original>
// kernel: tpu_custom_call.1
$region0: #{tpu_custom_call.1}
  #allocation0 [shape = 'u32[]', space=smem, size = 0x4, offset = 0x4, fixed_abs, tag = 'smem constant byte address 0x4 - core index']
  #allocation1 [shape = 'u32[72,128]{1,0:T(1,128)}', space=vmem, size = 0x9000, scoped, tag = 'internal scratch']
  #allocation2 [shape = 'f32[1,1]{1,0:T(1,128)S(1)}', space=vmem, size = 0x200, scoped, tag = 'scoped memory for tpu_custom_call.1']
  %s0 = inlined_call_operand.vmem [shape: f32[384,24], index: 0, kind: input, shape index: {}]
  %s1 = inlined_call_operand.vmem [shape: f32[384,4], index: 1, kind: input, shape index: {}]
  %s2 = inlined_call_operand.vmem [shape: bf16[24,128], index: 2, kind: input, shape index: {}]
  %s3 = inlined_call_operand.vmem [shape: bf16[4,128], index: 3, kind: input, shape index: {}]
  %s4 = inlined_call_operand.vmem [shape: f32[1,128], index: 4, kind: input, shape index: {}]
  %s5 = inlined_call_operand.vmem [shape: bf16[128,64], index: 5, kind: input, shape index: {}]
  %s6 = inlined_call_operand.vmem [shape: f32[1,64], index: 6, kind: input, shape index: {}]
  %s7 = inlined_call_operand.vmem [shape: f32[8,64], index: 7, kind: input, shape index: {}]
  %s8 = inlined_call_operand.<no memory space> [shape: f32[1,1], index: 8, kind: input, shape index: {}]
  %s9 = inlined_call_operand.hbm [shape: f32[1,384], index: 9, kind: output, shape index: {}]
  %s10 = sld [smem:[#allocation0]]
  $region69: #{tpu_custom_call.1} parent=0
    _
  %s12 = ssub.s32 1, %s10
  %s13 = scalar_select 0, %s12, %s10
  %v14 = vstv %s8
  %15 = vst [vmem:[#allocation2] sm:$0x1] %v14
  $region1: #{tpu_custom_call.1} parent=0
    #allocation3 [shape = 'u8[1024]{0}', space=vmem, size = 0x400, scoped, tag = 'output window, operand 0']
    #allocation4 [shape = 's32[2]{0}', space=sflag, size = 0x8, scoped, tag = 'scoped memory for tpu_custom_call.1']
    %16 = vsyncpa [#allocation4], 0
    %s17 = scalar_lea.sflag [#allocation4], 1
    %18 = vsyncpa %s17, 0
    loop: start=0, step=1, limit=5
    $region2: #{tpu_custom_call.1} parent=1 // loop_pre_header
      _
    $region3: #{tpu_custom_call.1} parent=1 // loop_header
      %s20 = sphi 0, %s24
      %p21 = scmp.ge.s32.totalorder %s20, 5
      %s30 = sphi 0, %s32
      %s33 = sphi 0, %s30
      %s34 = sphi 0, %s33
      %s50 = sphi 0, %s34
      %s56 = sphi 0, %s58
      %s59 = sphi 0, %s56
      %s60 = sphi 0, %s59
      %s76 = sphi 0, %s60
      %s80 = sphi 0, %s80
      %s82 = sphi 0, %s80
      %s83 = sphi 0, %s82
      %s97 = sphi 0, %s83
      %s101 = sphi 0, %s101
      %s103 = sphi 0, %s101
      %s104 = sphi 0, %s103
      %s118 = sphi 0, %s104
      %s122 = sphi 0, %s122
      %s124 = sphi 0, %s122
      %s125 = sphi 0, %s124
      %s139 = sphi 0, %s125
      %s143 = sphi 0, %s143
      %s145 = sphi 0, %s143
      %s146 = sphi 0, %s145
      %s160 = sphi 0, %s146
      %s164 = sphi 0, %s164
      %s166 = sphi 0, %s164
      %s167 = sphi 0, %s166
      %s181 = sphi 0, %s167
      %s185 = sphi 0, %s185
      %s187 = sphi 0, %s185
      %s188 = sphi 0, %s187
      %s202 = sphi 0, %s188
      %s206 = sphi 0, %s206
      %s208 = sphi 0, %s206
      %s209 = sphi 0, %s208
      %s223 = sphi 0, %s209
      %s229 = sphi 0, %s231
      %s232 = sphi 0, %s229
      %s233 = sphi 0, %s232
      %s249 = sphi 0, %s233
    $region4: #{tpu_custom_call.1} parent=1 // loop_header_branch
      %23 = sbr.rel (%p21) target = $region8
    $region5: #{tpu_custom_call.1} parent=1 // loop_body
      %s25 = ssub.s32 %s20, 1
      %s26 = ssub.s32 %s20, 2
      %s27 = sadd.s32 %s20, 1
      %s28 = ssub.s32 %s20, %s27
      %p29 = scmp.eq.s32.totalorder %s28, 0
      %s31 = sadd.s32 %s30, 1
      %s32 = scalar_select %p29, %s30, %s31
      %p35 = pneg %p29
      %p36 = scmp.eq.s32.totalorder %s20, 2
      %p37 = por %p35, %p36
      %p38 = scmp.ne.s32.totalorder %s30, %s33
      %p39 = scmp.eq.s32.totalorder %s20, 0
      %p40 = por %p38, %p39
      %p41 = scmp.ne.s32.totalorder %s30, %s33
      %p42 = scmp.eq.s32.totalorder %s25, 2
      %p43 = por %p41, %p42
      %p44 = scmp.ne.s32.totalorder %s33, %s34
      %p45 = scmp.eq.s32.totalorder %s25, 0
      %p46 = por %p44, %p45
      %p47 = scmp.ne.s32.totalorder %s33, %s34
      %p48 = scmp.eq.s32.totalorder %s26, 2
      %p49 = por %p47, %p48
      %p51 = scmp.ne.s32.totalorder %s34, %s50
      %p52 = scmp.eq.s32.totalorder %s26, 0
      %p53 = por %p51, %p52
      %s54 = ssub.s32 %s20, %s27
      %p55 = scmp.eq.s32.totalorder %s54, 0
      %s57 = sadd.s32 %s56, 1
      %s58 = scalar_select %p55, %s56, %s57
      %p61 = pneg %p55
      %p62 = scmp.eq.s32.totalorder %s20, 2
      %p63 = por %p61, %p62
      %p64 = scmp.ne.s32.totalorder %s56, %s59
      %p65 = scmp.eq.s32.totalorder %s20, 0
      %p66 = por %p64, %p65
      %p67 = scmp.ne.s32.totalorder %s56, %s59
      %p68 = scmp.eq.s32.totalorder %s25, 2
      %p69 = por %p67, %p68
      %p70 = scmp.ne.s32.totalorder %s59, %s60
      %p71 = scmp.eq.s32.totalorder %s25, 0
      %p72 = por %p70, %p71
      %p73 = scmp.ne.s32.totalorder %s59, %s60
      %p74 = scmp.eq.s32.totalorder %s26, 2
      %p75 = por %p73, %p74
      %p77 = scmp.ne.s32.totalorder %s60, %s76
      %p78 = scmp.eq.s32.totalorder %s26, 0
      %p79 = por %p77, %p78
      %s81 = sadd.s32 %s80, 1
      %p84 = scmp.eq.s32.totalorder %s20, 2
      %p85 = scmp.ne.s32.totalorder %s80, %s82
      %p86 = scmp.eq.s32.totalorder %s20, 0
      %p87 = por %p85, %p86
      %p88 = scmp.ne.s32.totalorder %s80, %s82
      %p89 = scmp.eq.s32.totalorder %s25, 2
      %p90 = por %p88, %p89
      %p91 = scmp.ne.s32.totalorder %s82, %s83
      %p92 = scmp.eq.s32.totalorder %s25, 0
      %p93 = por %p91, %p92
      %p94 = scmp.ne.s32.totalorder %s82, %s83
      %p95 = scmp.eq.s32.totalorder %s26, 2
      %p96 = por %p94, %p95
      %p98 = scmp.ne.s32.totalorder %s83, %s97
      %p99 = scmp.eq.s32.totalorder %s26, 0
      %p100 = por %p98, %p99
      %s102 = sadd.s32 %s101, 1
      %p105 = scmp.eq.s32.totalorder %s20, 2
      %p106 = scmp.ne.s32.totalorder %s101, %s103
      %p107 = scmp.eq.s32.totalorder %s20, 0
      %p108 = por %p106, %p107
      %p109 = scmp.ne.s32.totalorder %s101, %s103
      %p110 = scmp.eq.s32.totalorder %s25, 2
      %p111 = por %p109, %p110
      %p112 = scmp.ne.s32.totalorder %s103, %s104
      %p113 = scmp.eq.s32.totalorder %s25, 0
      %p114 = por %p112, %p113
      %p115 = scmp.ne.s32.totalorder %s103, %s104
      %p116 = scmp.eq.s32.totalorder %s26, 2
      %p117 = por %p115, %p116
      %p119 = scmp.ne.s32.totalorder %s104, %s118
      %p120 = scmp.eq.s32.totalorder %s26, 0
      %p121 = por %p119, %p120
      %s123 = sadd.s32 %s122, 1
      %p126 = scmp.eq.s32.totalorder %s20, 2
      %p127 = scmp.ne.s32.totalorder %s122, %s124
      %p128 = scmp.eq.s32.totalorder %s20, 0
      %p129 = por %p127, %p128
      %p130 = scmp.ne.s32.totalorder %s122, %s124
      %p131 = scmp.eq.s32.totalorder %s25, 2
      %p132 = por %p130, %p131
      %p133 = scmp.ne.s32.totalorder %s124, %s125
      %p134 = scmp.eq.s32.totalorder %s25, 0
      %p135 = por %p133, %p134
      %p136 = scmp.ne.s32.totalorder %s124, %s125
      %p137 = scmp.eq.s32.totalorder %s26, 2
      %p138 = por %p136, %p137
      %p140 = scmp.ne.s32.totalorder %s125, %s139
      %p141 = scmp.eq.s32.totalorder %s26, 0
      %p142 = por %p140, %p141
      %s144 = sadd.s32 %s143, 1
      %p147 = scmp.eq.s32.totalorder %s20, 2
      %p148 = scmp.ne.s32.totalorder %s143, %s145
      %p149 = scmp.eq.s32.totalorder %s20, 0
      %p150 = por %p148, %p149
      %p151 = scmp.ne.s32.totalorder %s143, %s145
      %p152 = scmp.eq.s32.totalorder %s25, 2
      %p153 = por %p151, %p152
      %p154 = scmp.ne.s32.totalorder %s145, %s146
      %p155 = scmp.eq.s32.totalorder %s25, 0
      %p156 = por %p154, %p155
      %p157 = scmp.ne.s32.totalorder %s145, %s146
      %p158 = scmp.eq.s32.totalorder %s26, 2
      %p159 = por %p157, %p158
      %p161 = scmp.ne.s32.totalorder %s146, %s160
      %p162 = scmp.eq.s32.totalorder %s26, 0
      %p163 = por %p161, %p162
      %s165 = sadd.s32 %s164, 1
      %p168 = scmp.eq.s32.totalorder %s20, 2
      %p169 = scmp.ne.s32.totalorder %s164, %s166
      %p170 = scmp.eq.s32.totalorder %s20, 0
      %p171 = por %p169, %p170
      %p172 = scmp.ne.s32.totalorder %s164, %s166
      %p173 = scmp.eq.s32.totalorder %s25, 2
      %p174 = por %p172, %p173
      %p175 = scmp.ne.s32.totalorder %s166, %s167
      %p176 = scmp.eq.s32.totalorder %s25, 0
      %p177 = por %p175, %p176
      %p178 = scmp.ne.s32.totalorder %s166, %s167
      %p179 = scmp.eq.s32.totalorder %s26, 2
      %p180 = por %p178, %p179
      %p182 = scmp.ne.s32.totalorder %s167, %s181
      %p183 = scmp.eq.s32.totalorder %s26, 0
      %p184 = por %p182, %p183
      %s186 = sadd.s32 %s185, 1
      %p189 = scmp.eq.s32.totalorder %s20, 2
      %p190 = scmp.ne.s32.totalorder %s185, %s187
      %p191 = scmp.eq.s32.totalorder %s20, 0
      %p192 = por %p190, %p191
      %p193 = scmp.ne.s32.totalorder %s185, %s187
      %p194 = scmp.eq.s32.totalorder %s25, 2
      %p195 = por %p193, %p194
      %p196 = scmp.ne.s32.totalorder %s187, %s188
      %p197 = scmp.eq.s32.totalorder %s25, 0
      %p198 = por %p196, %p197
      %p199 = scmp.ne.s32.totalorder %s187, %s188
      %p200 = scmp.eq.s32.totalorder %s26, 2
      %p201 = por %p199, %p200
      %p203 = scmp.ne.s32.totalorder %s188, %s202
      %p204 = scmp.eq.s32.totalorder %s26, 0
      %p205 = por %p203, %p204
      %s207 = sadd.s32 %s206, 1
      %p210 = scmp.eq.s32.totalorder %s20, 2
      %p211 = scmp.ne.s32.totalorder %s206, %s208
      %p212 = scmp.eq.s32.totalorder %s20, 0
      %p213 = por %p211, %p212
      %p214 = scmp.ne.s32.totalorder %s206, %s208
      %p215 = scmp.eq.s32.totalorder %s25, 2
      %p216 = por %p214, %p215
      %p217 = scmp.ne.s32.totalorder %s208, %s209
      %p218 = scmp.eq.s32.totalorder %s25, 0
      %p219 = por %p217, %p218
      %p220 = scmp.ne.s32.totalorder %s208, %s209
      %p221 = scmp.eq.s32.totalorder %s26, 2
      %p222 = por %p220, %p221
      %p224 = scmp.ne.s32.totalorder %s209, %s223
      %p225 = scmp.eq.s32.totalorder %s26, 0
      %p226 = por %p224, %p225
      %s227 = ssub.s32 %s20, %s27
      %p228 = scmp.eq.s32.totalorder %s227, 0
      %s230 = sadd.s32 %s229, 1
      %s231 = scalar_select %p228, %s229, %s230
      %p234 = pneg %p228
      %p235 = scmp.eq.s32.totalorder %s20, 2
      %p236 = por %p234, %p235
      %p237 = scmp.ne.s32.totalorder %s229, %s232
      %p238 = scmp.eq.s32.totalorder %s20, 0
      %p239 = por %p237, %p238
      %p240 = scmp.ne.s32.totalorder %s229, %s232
      %p241 = scmp.eq.s32.totalorder %s25, 2
      %p242 = por %p240, %p241
      %p243 = scmp.ne.s32.totalorder %s232, %s233
      %p244 = scmp.eq.s32.totalorder %s25, 0
      %p245 = por %p243, %p244
      %p246 = scmp.ne.s32.totalorder %s232, %s233
      %p247 = scmp.eq.s32.totalorder %s26, 2
      %p248 = por %p246, %p247
      %p250 = scmp.ne.s32.totalorder %s233, %s249
      %p251 = scmp.eq.s32.totalorder %s26, 0
      %p252 = por %p250, %p251
      %p253 = scmp.le.s32.totalorder 1, %s20
      %p254 = scmp.lt.s32.totalorder %s20, 4
      %p255 = pnand %p253, %p254
      %p256 = pneg %p255
      // Predicated region
      $region9: #{tpu_custom_call.1} parent=5 // pred_check
        _
      $region10: #{tpu_custom_call.1} parent=5 // pred_check_branch
        %258 = sbr.rel (%p255) target = $region12
      $region11: #{tpu_custom_call.1} parent=5 // pred_region
        %s259 = ssub.s32 %s20, 1
        // Predicated region
        $region13: #{tpu_custom_call.1} parent=11 // pred_check
          %p260 = pneg %p93
        $region14: #{tpu_custom_call.1} parent=11 // pred_check_branch
          %262 = sbr.rel (%p260) target = $region16
        $region15: #{tpu_custom_call.1} parent=11 // pred_region
          _
        $region16: #{tpu_custom_call.1} parent=11 // pred_fallthru
          _
        // Predicated region
        $region17: #{tpu_custom_call.1} parent=11 // pred_check
          %p263 = pneg %p114
        $region18: #{tpu_custom_call.1} parent=11 // pred_check_branch
          %265 = sbr.rel (%p263) target = $region20
        $region19: #{tpu_custom_call.1} parent=11 // pred_region
          _
        $region20: #{tpu_custom_call.1} parent=11 // pred_fallthru
          _
        // Predicated region
        $region21: #{tpu_custom_call.1} parent=11 // pred_check
          %p266 = pneg %p135
        $region22: #{tpu_custom_call.1} parent=11 // pred_check_branch
          %268 = sbr.rel (%p266) target = $region24
        $region23: #{tpu_custom_call.1} parent=11 // pred_region
          _
        $region24: #{tpu_custom_call.1} parent=11 // pred_fallthru
          _
        // Predicated region
        $region25: #{tpu_custom_call.1} parent=11 // pred_check
          %p269 = pneg %p156
        $region26: #{tpu_custom_call.1} parent=11 // pred_check_branch
          %271 = sbr.rel (%p269) target = $region28
        $region27: #{tpu_custom_call.1} parent=11 // pred_region
          _
        $region28: #{tpu_custom_call.1} parent=11 // pred_fallthru
          _
        // Predicated region
        $region29: #{tpu_custom_call.1} parent=11 // pred_check
          %p272 = pneg %p177
        $region30: #{tpu_custom_call.1} parent=11 // pred_check_branch
          %274 = sbr.rel (%p272) target = $region32
        $region31: #{tpu_custom_call.1} parent=11 // pred_region
          _
        $region32: #{tpu_custom_call.1} parent=11 // pred_fallthru
          _
        // Predicated region
        $region33: #{tpu_custom_call.1} parent=11 // pred_check
          %p275 = pneg %p198
        $region34: #{tpu_custom_call.1} parent=11 // pred_check_branch
          %277 = sbr.rel (%p275) target = $region36
        $region35: #{tpu_custom_call.1} parent=11 // pred_region
          _
        $region36: #{tpu_custom_call.1} parent=11 // pred_fallthru
          _
        // Predicated region
        $region37: #{tpu_custom_call.1} parent=11 // pred_check
          %p278 = pneg %p219
        $region38: #{tpu_custom_call.1} parent=11 // pred_check_branch
          %280 = sbr.rel (%p278) target = $region40
        $region39: #{tpu_custom_call.1} parent=11 // pred_region
          _
        $region40: #{tpu_custom_call.1} parent=11 // pred_fallthru
          _
      $region12: #{tpu_custom_call.1} parent=5 // pred_fallthru
        _
      %p281 = scmp.lt.s32.totalorder %s20, 3
      // Predicated region
      $region41: #{tpu_custom_call.1} parent=5 // pred_check
        %p282 = pneg %p281
      $region42: #{tpu_custom_call.1} parent=5 // pred_check_branch
        %284 = sbr.rel (%p282) target = $region44
      $region43: #{tpu_custom_call.1} parent=5 // pred_region
        // Predicated region
        $region45: #{tpu_custom_call.1} parent=43 // pred_check
          %p285 = pneg %p40
        $region46: #{tpu_custom_call.1} parent=43 // pred_check_branch
          %287 = sbr.rel (%p285) target = $region48
        $region47: #{tpu_custom_call.1} parent=43 // pred_region
          %s288 = smul.u32 16, %s20
          %p289 = scmp.lt.s32.totalorder %s288, 47
          %s290 = scalar_select %p289, %s288, 47
          %s291 = smul.addr %s290, 8
          %s292 = scalar_lea.vmem %s0, %s291
          %s293 = smul.u32 16, %s20
        $region48: #{tpu_custom_call.1} parent=43 // pred_fallthru
          _
        // Predicated region
        $region49: #{tpu_custom_call.1} parent=43 // pred_check
          %p294 = pneg %p66
        $region50: #{tpu_custom_call.1} parent=43 // pred_check_branch
          %296 = sbr.rel (%p294) target = $region52
        $region51: #{tpu_custom_call.1} parent=43 // pred_region
          %s297 = smul.u32 16, %s20
          %p298 = scmp.lt.s32.totalorder %s297, 47
          %s299 = scalar_select %p298, %s297, 47
          %s300 = smul.addr %s299, 8
          %s301 = scalar_lea.vmem %s1, %s300
          %s302 = smul.u32 16, %s20
        $region52: #{tpu_custom_call.1} parent=43 // pred_fallthru
          _
      $region44: #{tpu_custom_call.1} parent=5 // pred_fallthru
        _
      %p303 = scmp.le.s32.totalorder 1, %s20
      %p304 = scmp.lt.s32.totalorder %s20, 4
      %p305 = pnand %p303, %p304
      %p306 = pneg %p305
      // Predicated region
      $region53: #{tpu_custom_call.1} parent=5 // pred_check
        _
      $region54: #{tpu_custom_call.1} parent=5 // pred_check_branch
        %308 = sbr.rel (%p305) target = $region56
      $region55: #{tpu_custom_call.1} parent=5 // pred_region
        %s309 = ssub.s32 %s20, 1
        %s310 = smul.u32 16, %s25
        %p311 = scmp.lt.s32.totalorder %s310, 47
        %s312 = scalar_select %p311, %s310, 47
        %s313 = smul.addr %s312, 8
        %s314 = scalar_lea.vmem %s0, %s313
        %p315 = pneg %p46
        %p316 = pneg %p43
        %s317 = smul.u32 16, %s25
        %p318 = scmp.lt.s32.totalorder %s317, 47
        %s319 = scalar_select %p318, %s317, 47
        %s320 = smul.addr %s319, 8
        %s321 = scalar_lea.vmem %s1, %s320
        %p322 = pneg %p72
        %p323 = pneg %p69
        %p324 = pneg %p93
        %p325 = pneg %p90
        %p326 = pneg %p114
        %p327 = pneg %p111
        %p328 = pneg %p135
        %p329 = pneg %p132
        %p330 = pneg %p156
        %p331 = pneg %p153
        %p332 = pneg %p177
        %p333 = pneg %p174
        %p334 = pneg %p198
        %p335 = pneg %p195
        %p336 = pneg %p219
        %p337 = pneg %p216
        %p338 = pneg %p245
        %p339 = pneg %p242
        %s340 = sand.u32 %s232, 1
        %s341 = scalar_lea.sflag [#allocation4], %s340
        %s342 = sand.u32 %s232, 1
        %s343 = scalar_lea.vmem [#allocation3], %s342
        %s344 = smul.u32 16, %s25
        %p345 = scmp.lt.s32.totalorder %s344, 47
        %s346 = scalar_select %p345, %s344, 47
        %s347 = smul.addr %s346, 8
        %s348 = scalar_lea.vmem %s0, %s347
        %s349 = smul.u32 16, %s25
        %s350 = smul.u32 16, %s25
        %p351 = scmp.lt.s32.totalorder %s350, 47
        %s352 = scalar_select %p351, %s350, 47
        %s353 = smul.addr %s352, 8
        %s354 = scalar_lea.vmem %s1, %s353
        %s355 = smul.u32 16, %s25
        %v357 = vld [vmem:[%s348] sm:$0xff]
        %v358 = vld [vmem:[%s348 + $0x8] sm:$0xff]
        %v359 = vld [vmem:[%s348 + $0x10] sm:$0xff]
        %v360 = vld [vmem:[%s348 + $0x18] sm:$0xff]
        %v361 = vld [vmem:[%s348 + $0x20] sm:$0xff]
        %v362 = vld [vmem:[%s348 + $0x28] sm:$0xff]
        %v363 = vld [vmem:[%s348 + $0x30] sm:$0xff]
        %v364 = vld [vmem:[%s348 + $0x38] sm:$0xff]
        %v365 = vld [vmem:[%s348 + $0x40] sm:$0xff]
        %v366 = vld [vmem:[%s348 + $0x48] sm:$0xff]
        %v367 = vld [vmem:[%s348 + $0x50] sm:$0xff]
        %v368 = vld [vmem:[%s348 + $0x58] sm:$0xff]
        %v369 = vld [vmem:[%s348 + $0x60] sm:$0xff]
        %v370 = vld [vmem:[%s348 + $0x68] sm:$0xff]
        %v371 = vld [vmem:[%s348 + $0x70] sm:$0xff]
        %v372 = vld [vmem:[%s348 + $0x78] sm:$0xff]
        %v373 = vpack.c.bf16 %v358, %v357
        %v374 = vpack.c.bf16 %v360, %v359
        %v375 = vpack.c.bf16 %v362, %v361
        %v376 = vpack.c.bf16 %v364, %v363
        %v377 = vpack.c.bf16 %v366, %v365
        %v378 = vpack.c.bf16 %v368, %v367
        %v379 = vpack.c.bf16 %v370, %v369
        %v380 = vpack.c.bf16 %v372, %v371
        %v381 = vld [vmem:[%s2] sm:$0xf]
        %v382 = vld [vmem:[%s2 + $0x4] sm:$0xf]
        %v383 = vld [vmem:[%s2 + $0x8] sm:$0xf]
        %v384 = vld [vmem:[%s354] sm:$0xff]
        %v385 = vld [vmem:[%s354 + $0x8] sm:$0xff]
        %v386 = vld [vmem:[%s354 + $0x10] sm:$0xff]
        %v387 = vld [vmem:[%s354 + $0x18] sm:$0xff]
        %v388 = vld [vmem:[%s354 + $0x20] sm:$0xff]
        %v389 = vld [vmem:[%s354 + $0x28] sm:$0xff]
        %v390 = vld [vmem:[%s354 + $0x30] sm:$0xff]
        %v391 = vld [vmem:[%s354 + $0x38] sm:$0xff]
        %v392 = vld [vmem:[%s354 + $0x40] sm:$0xff]
        %v393 = vld [vmem:[%s354 + $0x48] sm:$0xff]
        %v394 = vld [vmem:[%s354 + $0x50] sm:$0xff]
        %v395 = vld [vmem:[%s354 + $0x58] sm:$0xff]
        %v396 = vld [vmem:[%s354 + $0x60] sm:$0xff]
        %v397 = vld [vmem:[%s354 + $0x68] sm:$0xff]
        %v398 = vld [vmem:[%s354 + $0x70] sm:$0xff]
        %v399 = vld [vmem:[%s354 + $0x78] sm:$0xff]
        %v400 = vpack.c.bf16 %v385, %v384
        %v401 = vpack.c.bf16 %v387, %v386
        %v402 = vpack.c.bf16 %v389, %v388
        %v403 = vpack.c.bf16 %v391, %v390
        %v404 = vpack.c.bf16 %v393, %v392
        %v405 = vpack.c.bf16 %v395, %v394
        %v406 = vpack.c.bf16 %v397, %v396
        %v407 = vpack.c.bf16 %v399, %v398
        %v408 = vld [vmem:[%s3] sm:$0x3]
        %vm409 = vcmask 31744
        %v411 = vsel %vm409, %v400, 0
        %v414 = vsel %vm409, %v401, 0
        %v417 = vsel %vm409, %v402, 0
        %v420 = vsel %vm409, %v403, 0
        %v423 = vsel %vm409, %v404, 0
        %v426 = vsel %vm409, %v405, 0
        %v429 = vsel %vm409, %v406, 0
        %v432 = vsel %vm409, %v407, 0
        %vm434 = vcmask 1041408
        %v436 = vsel %vm434, %v408, 0
        %438 = vmatpush.bf16.msra.mxu0 0
        %439 = vmatpush.bf16.msra.mxu0 0
        %440 = vmatpush.bf16.msra.mxu0 0
        %441 = vmatpush.bf16.msra.mxu0 0
        %442 = vmatpush.bf16.msra.mxu0 0
        %443 = vmatpush.bf16.msra.mxu0 0
        %444 = vmatpush.bf16.msra.mxu0 0
        %445 = vmatpush.bf16.msra.mxu0 %v436
        %446 = vmatmul.bf16.gmra.mxu0 %v411
        %v447 = vpop.f32.mrf.mxu0
        %v448 = vadd.f32 0.0, %v447
        %v449 = vpop.f32.mrf.mxu0
        %v450 = vadd.f32 0.0, %v449
        %451 = vmatmul.bf16.gmra.mxu0 %v414
        %v452 = vpop.f32.mrf.mxu0
        %v453 = vadd.f32 0.0, %v452
        %v454 = vpop.f32.mrf.mxu0
        %v455 = vadd.f32 0.0, %v454
        %456 = vmatmul.bf16.gmra.mxu0 %v417
        %v457 = vpop.f32.mrf.mxu0
        %v458 = vadd.f32 0.0, %v457
        %v459 = vpop.f32.mrf.mxu0
        %v460 = vadd.f32 0.0, %v459
        %461 = vmatmul.bf16.gmra.mxu0 %v420
        %v462 = vpop.f32.mrf.mxu0
        %v463 = vadd.f32 0.0, %v462
        %v464 = vpop.f32.mrf.mxu0
        %v465 = vadd.f32 0.0, %v464
        %466 = vmatmul.bf16.gmra.mxu0 %v423
        %v467 = vpop.f32.mrf.mxu0
        %v468 = vadd.f32 0.0, %v467
        %v469 = vpop.f32.mrf.mxu0
        %v470 = vadd.f32 0.0, %v469
        %471 = vmatmul.bf16.gmra.mxu0 %v426
        %v472 = vpop.f32.mrf.mxu0
        %v473 = vadd.f32 0.0, %v472
        %v474 = vpop.f32.mrf.mxu0
        %v475 = vadd.f32 0.0, %v474
        %476 = vmatmul.bf16.gmra.mxu0 %v429
        %v477 = vpop.f32.mrf.mxu0
        %v478 = vadd.f32 0.0, %v477
        %v479 = vpop.f32.mrf.mxu0
        %v480 = vadd.f32 0.0, %v479
        %481 = vmatmul.bf16.gmra.mxu0 %v432
        %v482 = vpop.f32.mrf.mxu0
        %v483 = vadd.f32 0.0, %v482
        %v484 = vpop.f32.mrf.mxu0
        %v485 = vadd.f32 0.0, %v484
        %486 = vdwg.mxu0
        %v490 = vunpack.c.l.b16 %v381
        %v491 = vunpack.c.l.b16 %v382
        %v492 = vunpack.c.l.b16 %v383
        %v493 = vpack.c.b16 %v491, %v490
        %v494 = vpack.c.b16 %v492, %v492
        %vm496 = vcmask 195584
        %v498 = vsel %vm496, %v373, 0
        %v501 = vsel %vm496, %v374, 0
        %v504 = vsel %vm496, %v375, 0
        %v507 = vsel %vm496, %v376, 0
        %v510 = vsel %vm496, %v377, 0
        %v513 = vsel %vm496, %v378, 0
        %v516 = vsel %vm496, %v379, 0
        %v519 = vsel %vm496, %v380, 0
        %vm521 = vcmask 1043456
        %v523 = vsel %vm521, %v494, 0
        %525 = vmatpush.bf16.msra.mxu0 0
        %526 = vmatpush.bf16.msra.mxu0 0
        %527 = vmatpush.bf16.msra.mxu0 0
        %528 = vmatpush.bf16.msra.mxu0 0
        %529 = vmatpush.bf16.msra.mxu0 0
        %530 = vmatpush.bf16.msra.mxu0 0
        %531 = vmatpush.bf16.msra.mxu0 %v523
        %532 = vmatpush.bf16.msra.mxu0 %v493
        %533 = vmatmul.bf16.gmra.mxu0 %v498
        %v534 = vpop.f32.mrf.mxu0
        %v535 = vadd.f32 %v448, %v534
        %v536 = vpop.f32.mrf.mxu0
        %v537 = vadd.f32 %v450, %v536
        %538 = vmatmul.bf16.gmra.mxu0 %v501
        %v539 = vpop.f32.mrf.mxu0
        %v540 = vadd.f32 %v453, %v539
        %v541 = vpop.f32.mrf.mxu0
        %v542 = vadd.f32 %v455, %v541
        %543 = vmatmul.bf16.gmra.mxu0 %v504
        %v544 = vpop.f32.mrf.mxu0
        %v545 = vadd.f32 %v458, %v544
        %v546 = vpop.f32.mrf.mxu0
        %v547 = vadd.f32 %v460, %v546
        %548 = vmatmul.bf16.gmra.mxu0 %v507
        %v549 = vpop.f32.mrf.mxu0
        %v550 = vadd.f32 %v463, %v549
        %v551 = vpop.f32.mrf.mxu0
        %v552 = vadd.f32 %v465, %v551
        %553 = vmatmul.bf16.gmra.mxu0 %v510
        %v554 = vpop.f32.mrf.mxu0
        %v555 = vadd.f32 %v468, %v554
        %v556 = vpop.f32.mrf.mxu0
        %v557 = vadd.f32 %v470, %v556
        %558 = vmatmul.bf16.gmra.mxu0 %v513
        %v559 = vpop.f32.mrf.mxu0
        %v560 = vadd.f32 %v473, %v559
        %v561 = vpop.f32.mrf.mxu0
        %v562 = vadd.f32 %v475, %v561
        %563 = vmatmul.bf16.gmra.mxu0 %v516
        %v564 = vpop.f32.mrf.mxu0
        %v565 = vadd.f32 %v478, %v564
        %v566 = vpop.f32.mrf.mxu0
        %v567 = vadd.f32 %v480, %v566
        %568 = vmatmul.bf16.gmra.mxu0 %v519
        %v569 = vpop.f32.mrf.mxu0
        %v570 = vadd.f32 %v483, %v569
        %v571 = vpop.f32.mrf.mxu0
        %v572 = vadd.f32 %v485, %v571
        %573 = vdwg.mxu0
        %v574 = vld [vmem:[%s4] sm:$0x1]
        %v576 = vperm.slane %v574, 0
        %v578 = vadd.f32 %v535, %v576
        %v579 = vadd.f32 %v537, %v576
        %v580 = vadd.f32 %v540, %v576
        %v581 = vadd.f32 %v542, %v576
        %v582 = vadd.f32 %v545, %v576
        %v583 = vadd.f32 %v547, %v576
        %v584 = vadd.f32 %v550, %v576
        %v585 = vadd.f32 %v552, %v576
        %v586 = vadd.f32 %v555, %v576
        %v587 = vadd.f32 %v557, %v576
        %v588 = vadd.f32 %v560, %v576
        %v589 = vadd.f32 %v562, %v576
        %v590 = vadd.f32 %v565, %v576
        %v591 = vadd.f32 %v567, %v576
        %v592 = vadd.f32 %v570, %v576
        %v593 = vadd.f32 %v572, %v576
        %v594 = vmax.f32 %v578, 0.0
        %v595 = vmax.f32 %v579, 0.0
        %v596 = vmax.f32 %v580, 0.0
        %v597 = vmax.f32 %v581, 0.0
        %v598 = vmax.f32 %v582, 0.0
        %v599 = vmax.f32 %v583, 0.0
        %v600 = vmax.f32 %v584, 0.0
        %v601 = vmax.f32 %v585, 0.0
        %v602 = vmax.f32 %v586, 0.0
        %v603 = vmax.f32 %v587, 0.0
        %v604 = vmax.f32 %v588, 0.0
        %v605 = vmax.f32 %v589, 0.0
        %v606 = vmax.f32 %v590, 0.0
        %v607 = vmax.f32 %v591, 0.0
        %v608 = vmax.f32 %v592, 0.0
        %v609 = vmax.f32 %v593, 0.0
        %v610 = vpack.c.bf16 %v595, %v594
        %v611 = vpack.c.bf16 %v597, %v596
        %v612 = vpack.c.bf16 %v599, %v598
        %v613 = vpack.c.bf16 %v601, %v600
        %v614 = vpack.c.bf16 %v603, %v602
        %v615 = vpack.c.bf16 %v605, %v604
        %v616 = vpack.c.bf16 %v607, %v606
        %v617 = vpack.c.bf16 %v609, %v608
        %v618 = vld [vmem:[%s5] sm:$0xf]
        %v619 = vld [vmem:[%s5 + $0x4] sm:$0xf]
        %v620 = vld [vmem:[%s5 + $0x8] sm:$0xf]
        %v621 = vld [vmem:[%s5 + $0xc] sm:$0xf]
        %v622 = vld [vmem:[%s5 + $0x10] sm:$0xf]
        %v623 = vld [vmem:[%s5 + $0x14] sm:$0xf]
        %v624 = vld [vmem:[%s5 + $0x18] sm:$0xf]
        %v625 = vld [vmem:[%s5 + $0x1c] sm:$0xf]
        %v626 = vld [vmem:[%s5 + $0x20] sm:$0xf]
        %v627 = vld [vmem:[%s5 + $0x24] sm:$0xf]
        %v628 = vld [vmem:[%s5 + $0x28] sm:$0xf]
        %v629 = vld [vmem:[%s5 + $0x2c] sm:$0xf]
        %v630 = vld [vmem:[%s5 + $0x30] sm:$0xf]
        %v631 = vld [vmem:[%s5 + $0x34] sm:$0xf]
        %v632 = vld [vmem:[%s5 + $0x38] sm:$0xf]
        %v633 = vld [vmem:[%s5 + $0x3c] sm:$0xf]
        %v634 = vld [vmem:[%s6] sm:$0x1]
        %v636 = vperm.slane %v634, 0
        %v654 = vunpack.c.l.b16 %v618
        %v655 = vunpack.c.l.b16 %v619
        %v656 = vunpack.c.l.b16 %v620
        %v657 = vunpack.c.l.b16 %v621
        %v658 = vunpack.c.l.b16 %v622
        %v659 = vunpack.c.l.b16 %v623
        %v660 = vunpack.c.l.b16 %v624
        %v661 = vunpack.c.l.b16 %v625
        %v662 = vunpack.c.l.b16 %v626
        %v663 = vunpack.c.l.b16 %v627
        %v664 = vunpack.c.l.b16 %v628
        %v665 = vunpack.c.l.b16 %v629
        %v666 = vunpack.c.l.b16 %v630
        %v667 = vunpack.c.l.b16 %v631
        %v668 = vunpack.c.l.b16 %v632
        %v669 = vunpack.c.l.b16 %v633
        %v670 = vpack.c.b16 %v655, %v654
        %v671 = vpack.c.b16 %v657, %v656
        %v672 = vpack.c.b16 %v659, %v658
        %v673 = vpack.c.b16 %v661, %v660
        %v674 = vpack.c.b16 %v663, %v662
        %v675 = vpack.c.b16 %v665, %v664
        %v676 = vpack.c.b16 %v667, %v666
        %v677 = vpack.c.b16 %v669, %v668
        %686 = vmatpush.bf16.msra.mxu0 %v677
        %687 = vmatpush.bf16.msra.mxu0 %v676
        %688 = vmatpush.bf16.msra.mxu0 %v675
        %689 = vmatpush.bf16.msra.mxu0 %v674
        %690 = vmatpush.bf16.msra.mxu0 %v673
        %691 = vmatpush.bf16.msra.mxu0 %v672
        %692 = vmatpush.bf16.msra.mxu0 %v671
        %693 = vmatpush.bf16.msra.mxu0 %v670
        %694 = vmatmul.bf16.gmra.mxu0 %v610
        %v695 = vpop.f32.mrf.mxu0
        %v696 = vadd.f32 %v636, %v695
        %v697 = vpop.f32.mrf.mxu0
        %v698 = vadd.f32 %v636, %v697
        %699 = vmatmul.bf16.gmra.mxu0 %v611
        %v700 = vpop.f32.mrf.mxu0
        %v701 = vadd.f32 %v636, %v700
        %v702 = vpop.f32.mrf.mxu0
        %v703 = vadd.f32 %v636, %v702
        %704 = vmatmul.bf16.gmra.mxu0 %v612
        %v705 = vpop.f32.mrf.mxu0
        %v706 = vadd.f32 %v636, %v705
        %v707 = vpop.f32.mrf.mxu0
        %v708 = vadd.f32 %v636, %v707
        %709 = vmatmul.bf16.gmra.mxu0 %v613
        %v710 = vpop.f32.mrf.mxu0
        %v711 = vadd.f32 %v636, %v710
        %v712 = vpop.f32.mrf.mxu0
        %v713 = vadd.f32 %v636, %v712
        %714 = vmatmul.bf16.gmra.mxu0 %v614
        %v715 = vpop.f32.mrf.mxu0
        %v716 = vadd.f32 %v636, %v715
        %v717 = vpop.f32.mrf.mxu0
        %v718 = vadd.f32 %v636, %v717
        %719 = vmatmul.bf16.gmra.mxu0 %v615
        %v720 = vpop.f32.mrf.mxu0
        %v721 = vadd.f32 %v636, %v720
        %v722 = vpop.f32.mrf.mxu0
        %v723 = vadd.f32 %v636, %v722
        %724 = vmatmul.bf16.gmra.mxu0 %v616
        %v725 = vpop.f32.mrf.mxu0
        %v726 = vadd.f32 %v636, %v725
        %v727 = vpop.f32.mrf.mxu0
        %v728 = vadd.f32 %v636, %v727
        %729 = vmatmul.bf16.gmra.mxu0 %v617
        %v730 = vpop.f32.mrf.mxu0
        %v731 = vadd.f32 %v636, %v730
        %v732 = vpop.f32.mrf.mxu0
        %v733 = vadd.f32 %v636, %v732
        %734 = vdwg.mxu0
        %v735 = vmax.f32 %v696, 0.0
        %v736 = vmax.f32 %v698, 0.0
        %v737 = vmax.f32 %v701, 0.0
        %v738 = vmax.f32 %v703, 0.0
        %v739 = vmax.f32 %v706, 0.0
        %v740 = vmax.f32 %v708, 0.0
        %v741 = vmax.f32 %v711, 0.0
        %v742 = vmax.f32 %v713, 0.0
        %v743 = vmax.f32 %v716, 0.0
        %v744 = vmax.f32 %v718, 0.0
        %v745 = vmax.f32 %v721, 0.0
        %v746 = vmax.f32 %v723, 0.0
        %v747 = vmax.f32 %v726, 0.0
        %v748 = vmax.f32 %v728, 0.0
        %v749 = vmax.f32 %v731, 0.0
        %v750 = vmax.f32 %v733, 0.0
        %v751 = vld [vmem:[%s7] sm:$0xff]
        %vm752 = vcmask 523264
        %v754 = vsel %vm752, %v751, 0
        %v757 = vsel %vm752, %v735, 0
        %v760 = vsel %vm752, %v736, 0
        %v763 = vsel %vm752, %v737, 0
        %v766 = vsel %vm752, %v738, 0
        %v769 = vsel %vm752, %v739, 0
        %v772 = vsel %vm752, %v740, 0
        %v775 = vsel %vm752, %v741, 0
        %v778 = vsel %vm752, %v742, 0
        %v781 = vsel %vm752, %v743, 0
        %v784 = vsel %vm752, %v744, 0
        %v787 = vsel %vm752, %v745, 0
        %v790 = vsel %vm752, %v746, 0
        %v793 = vsel %vm752, %v747, 0
        %v796 = vsel %vm752, %v748, 0
        %v799 = vsel %vm752, %v749, 0
        %v802 = vsel %vm752, %v750, 0
        %804 = vmatpush.xpose.msra.mxu0 %v802
        %805 = vmatpush.xpose.msra.mxu0 %v799
        %806 = vmatpush.xpose.msra.mxu0 %v796
        %807 = vmatpush.xpose.msra.mxu0 %v793
        %808 = vmatpush.xpose.msra.mxu0 %v790
        %809 = vmatpush.xpose.msra.mxu0 %v787
        %810 = vmatpush.xpose.msra.mxu0 %v784
        %811 = vmatpush.xpose.msra.mxu0 %v781
        %812 = vmatpush.xpose.msra.mxu0 %v778
        %813 = vmatpush.xpose.msra.mxu0 %v775
        %814 = vmatpush.xpose.msra.mxu0 %v772
        %815 = vmatpush.xpose.msra.mxu0 %v769
        %816 = vmatpush.xpose.msra.mxu0 %v766
        %817 = vmatpush.xpose.msra.mxu0 %v763
        %818 = vmatpush.xpose.msra.mxu0 %v760
        %819 = vmatpush.xpose.msra.mxu0 %v757
        %820 = vmatmul.f32.gmra.mxu0 %v754
        %v821 = vpop.f32.mrf.mxu0
        %v822 = vadd.f32 0.0, %v821
        %823 = vdwg.mxu0
        %v824 = vld [vmem:[#allocation2] sm:$0x1]
        %826 = vset.pattern.permute.xlu0 0
        %827 = vperm.xlu0 %826, %v824
        %v828 = vpop.permute.xlu0 %827
        %v830 = vperm.slane %v828, 0
        %v831 = vadd.f32 %v822, %v830
        %832 = vst [vmem:[%s343] sm:$0x1] %v831
        %s833 = sand.u32 %s232, 1
        %s834 = scalar_lea.sflag [#allocation4], %s833
        %s835 = sand.u32 %s232, 1
        %s836 = scalar_lea.vmem [#allocation3], %s835
        // Predicated region
        $region57: #{tpu_custom_call.1} parent=55 // pred_check
          %p837 = pneg %p242
        $region58: #{tpu_custom_call.1} parent=55 // pred_check_branch
          %839 = sbr.rel (%p837) target = $region60
        $region59: #{tpu_custom_call.1} parent=55 // pred_region
          %841 = vsyncadd %s834, 0
          %s842 = scalar_lea.hbm %s9, %s25
          %s844 = sshll.u32 %s836, 4
          %s845 = int_to_ptr.vmem [resolvable:$true] %s844
          %s846 = sshll.u32 %s842, 4
          %s847 = int_to_ptr.hbm [resolvable:$true] %s846
          %849 = dma.vmem_to_hbm [thread:$0]  %s845, 16, %s847, %s834
        $region60: #{tpu_custom_call.1} parent=55 // pred_fallthru
          _
      $region56: #{tpu_custom_call.1} parent=5 // pred_fallthru
        _
      %p850 = scmp.le.s32.totalorder 2, %s20
      // Predicated region
      $region61: #{tpu_custom_call.1} parent=5 // pred_check
        %p851 = pneg %p850
      $region62: #{tpu_custom_call.1} parent=5 // pred_check_branch
        %853 = sbr.rel (%p851) target = $region64
      $region63: #{tpu_custom_call.1} parent=5 // pred_region
        %s854 = ssub.s32 %s20, 2
        // Predicated region
        $region65: #{tpu_custom_call.1} parent=63 // pred_check
          %p855 = pneg %p248
        $region66: #{tpu_custom_call.1} parent=63 // pred_check_branch
          %857 = sbr.rel (%p855) target = $region68
        $region67: #{tpu_custom_call.1} parent=63 // pred_region
          %s858 = sand.u32 %s233, 1
          %s859 = scalar_lea.sflag [#allocation4], %s858
          %s860 = sand.u32 %s233, 1
          %s861 = scalar_lea.vmem [#allocation3], %s860
          %863 = dma.done %s859, 16
        $region68: #{tpu_custom_call.1} parent=63 // pred_fallthru
          _
      $region64: #{tpu_custom_call.1} parent=5 // pred_fallthru
        _
    $region6: #{tpu_custom_call.1} parent=1 // loop_footer
      %s24 = sadd.s32 1, %s20
    $region7: #{tpu_custom_call.1} parent=1 // loop_footer_branch
      %19 = sbr.rel target = $region3
    $region8: #{tpu_custom_call.1} parent=1 // loop_exit
      _
    %864 = vsyncpa [#allocation4], 1
    %s865 = scalar_lea.sflag [#allocation4], 1
    %866 = vsyncpa %s865, 1

</llo_original>
